<compile_context>
chip_gen: v7x
topology: tpu7x:2x2x1
jax: 0.10.0
libtpu: 0.0.40
codegen_flags: <defaults>
</compile_context>

<pallas_src>
import jax
import jax.numpy as jnp
from jax.experimental import pallas as pl
from jax.experimental.pallas import tpu as pltpu

_LANE = 128
_SUBLANE = 8


def mlp_kernel(params_ref, x_ref, o_ref):
    # params layout (SMEM f32[9]):
    #   [w1[0,0], w1[0,1], w1[1,0], w1[1,1], b1[0], b1[1], w2[0,0], w2[0,1], b2[0]]
    # x_ref: (2, R, 128) -- feature-major, samples dense over (sublane, lane).
    x0 = x_ref[0].astype(jnp.float32)   # (R, 128) feature 0
    x1 = x_ref[1].astype(jnp.float32)   # (R, 128) feature 1

    w100 = params_ref[0]
    w101 = params_ref[1]
    w110 = params_ref[2]
    w111 = params_ref[3]
    b10 = params_ref[4]
    b11 = params_ref[5]
    w200 = params_ref[6]
    w201 = params_ref[7]
    b20 = params_ref[8]

    # fc1 + ReLU  (h[:, j] = sum_k x[:, k] * W1[j, k] + b1[j])
    h0 = jnp.maximum(x0 * w100 + x1 * w101 + b10, 0.0)
    h1 = jnp.maximum(x0 * w110 + x1 * w111 + b11, 0.0)
    # fc2  (y[:, 0] = h0 * W2[0,0] + h1 * W2[0,1] + b2[0])
    y = h0 * w200 + h1 * w201 + b20

    o_ref[...] = y.astype(o_ref.dtype)


def _pack_params(w1, b1, w2, b2):
    return jnp.concatenate(
        [w1.reshape(-1), b1.reshape(-1), w2.reshape(-1), b2.reshape(-1)]
    ).astype(jnp.float32)  # (9,)


def simple_nn_forward_feature_major(x_fm, w1, b1, w2, b2, *, block_rows=2048):
    """Preferred entry point: x_fm is feature-major [2, B]; returns [B, 1]."""
    F, B = x_fm.shape
    assert F == 2, "SimpleNN expects 2 input features"
    out_dtype = x_fm.dtype

    params = _pack_params(w1, b1, w2, b2)

    # Pad the batch only up to a multiple of 1024 (8 sublanes x 128 lanes) so
    # the feature-major array reshapes (free, contiguous) into full vregs.
    b_pad = pl.cdiv(B, _LANE * _SUBLANE) * (_LANE * _SUBLANE)
    if b_pad != B:
        x_fm = jnp.pad(x_fm, ((0, 0), (0, b_pad - B)))
    rows = b_pad // _LANE
    x3 = x_fm.reshape(2, rows, _LANE)   # free, contiguous reshape

    # Big, sublane-dense blocks; >= 2 grid steps when possible so the
    # "parallel" axis can be split across v7x's two TensorCores.
    r_blk = min(block_rows, rows)
    if rows >= 2 * _SUBLANE:
        r_blk = min(r_blk, pl.cdiv(rows, 2))
    r_blk = max(_SUBLANE, (r_blk // _SUBLANE) * _SUBLANE)
    grid = (pl.cdiv(rows, r_blk),)

    y2 = pl.pallas_call(
        mlp_kernel,
        out_shape=jax.ShapeDtypeStruct((rows, _LANE), out_dtype),
        grid=grid,
        in_specs=[
            # 9 scalars, whole array in SMEM every grid step.
            pl.BlockSpec(memory_space=pltpu.MemorySpace.SMEM),
            # Feature-major input tiled along the sublane/row axis.
            pl.BlockSpec((2, r_blk, _LANE), lambda i: (0, i, 0)),
        ],
        out_specs=pl.BlockSpec((r_blk, _LANE), lambda i: (i, 0)),
        compiler_params=pltpu.CompilerParams(
            dimension_semantics=("parallel",),
            vmem_limit_bytes=48 * 1024 * 1024,
        ),
    )(params, x3)

    # Back to PyTorch's [B, 1] layout (free reshape + slice off the pad).
    return y2.reshape(b_pad, 1)[:B]


def simple_nn_forward(x, w1, b1, w2, b2, *, block_rows=2048,
                      min_pallas_batch=16384, force_pallas=False):
    """x: [B, 2] (PyTorch layout); y = relu(x @ W1.T + b1) @ W2.T + b2 -> [B, 1]."""
    B, F = x.shape
    assert F == 2, "SimpleNN expects 2 input features"

    if B < min_pallas_batch and not force_pallas:
        # Small-batch fast path: transpose/pad/launch overhead dominates below
        # ~16K samples; XLA's fused elementwise expression is strictly faster.
        return jnp.maximum(x @ w1.T + b1, 0.0) @ w2.T + b2

    # TODO(synk): if the caller can supply x already in feature-major [2, B]
    # layout, call simple_nn_forward_feature_major directly and skip this
    # transpose -- it is the only remaining wrapper-side HBM copy.
    return simple_nn_forward_feature_major(
        jnp.transpose(x), w1, b1, w2, b2, block_rows=block_rows)


if __name__ == "__main__":
    key = jax.random.PRNGKey(0)
    k_x, k_w1, k_b1, k_w2, k_b2, k_x2 = jax.random.split(key, 6)

    # Shapes from SimpleNN.__init__:
    #   fc1: Linear(2, 2) -> W1 [2, 2], b1 [2]
    #   fc2: Linear(2, 1) -> W2 [1, 2], b2 [1]
    w1 = jax.random.uniform(k_w1, (2, 2), minval=-0.5, maxval=0.5, dtype=jnp.float32)
    b1 = jax.random.uniform(k_b1, (2,), minval=-0.5, maxval=0.5, dtype=jnp.float32)
    w2 = jax.random.uniform(k_w2, (1, 2), minval=-0.5, maxval=0.5, dtype=jnp.float32)
    b2 = jax.random.uniform(k_b2, (1,), minval=-0.5, maxval=0.5, dtype=jnp.float32)

    def ref_fwd(xx):
        return jnp.maximum(xx @ w1.T + b1, 0.0) @ w2.T + b2

    # 1) Small demo batch, forced through the Pallas kernel (single grid step).
    batch = 8
    x = jax.random.normal(k_x, (batch, 2), dtype=jnp.float32)
    out = simple_nn_forward(x, w1, b1, w2, b2, force_pallas=True)
    jax.block_until_ready(out)
    assert out.shape == (batch, 1)
    assert jnp.allclose(out, ref_fwd(x), atol=1e-5, rtol=1e-5)

    # 2) Non-multiple-of-1024 batch exercising multiple grid steps + unpadding.
    batch2 = 3000
    x2 = jax.random.normal(k_x2, (batch2, 2), dtype=jnp.float32)
    out2 = simple_nn_forward(x2, w1, b1, w2, b2, force_pallas=True)
    jax.block_until_ready(out2)
    assert out2.shape == (batch2, 1)
    assert jnp.allclose(out2, ref_fwd(x2), atol=1e-5, rtol=1e-5)

    # 3) Default small-batch fast path (no Pallas) still matches.
    out3 = simple_nn_forward(x, w1, b1, w2, b2)
    jax.block_until_ready(out3)
    assert jnp.allclose(out3, ref_fwd(x), atol=1e-5, rtol=1e-5)

    print("KERNEL_OK")
</pallas_src>

<mosaic_0001>
module attributes {stable_mosaic.version = 11 : i64} {
  func.func @mlp_kernel(%arg0: i32, %arg1: memref<9xf32, #tpu.memory_space<smem>>, %arg2: memref<2x8x128xf32, #tpu.memory_space<vmem>>, %arg3: memref<8x128xf32, #tpu.memory_space<vmem>>) attributes {dimension_semantics = [#tpu.dimension_semantics<parallel>], iteration_bounds = array<i64: 1>, scalar_prefetch = 0 : i64, scratch_operands = 0 : i64, tpu.core_type = #tpu.core_type<tc>, window_params = [{transform_indices = @transform_0, window_bounds = array<i64: 9>}, {transform_indices = @transform_1, window_bounds = array<i64: 2, 8, 128>}, {transform_indices = @transform_2, window_bounds = array<i64: 8, 128>}]} {
    %c0 = arith.constant 0 : index
    %c0_0 = arith.constant 0 : index
    %c0_1 = arith.constant 0 : index
    %0 = vector.load %arg2[%c0, %c0_0, %c0_1] : memref<2x8x128xf32, #tpu.memory_space<vmem>>, vector<1x8x128xf32>
    %1 = vector.shape_cast %0 : vector<1x8x128xf32> to vector<8x128xf32>
    %c1 = arith.constant 1 : index
    %c0_2 = arith.constant 0 : index
    %c0_3 = arith.constant 0 : index
    %2 = vector.load %arg2[%c1, %c0_2, %c0_3] : memref<2x8x128xf32, #tpu.memory_space<vmem>>, vector<1x8x128xf32>
    %3 = vector.shape_cast %2 : vector<1x8x128xf32> to vector<8x128xf32>
    %c0_4 = arith.constant 0 : index
    %4 = memref.load %arg1[%c0_4] : memref<9xf32, #tpu.memory_space<smem>>
    %c1_5 = arith.constant 1 : index
    %5 = memref.load %arg1[%c1_5] : memref<9xf32, #tpu.memory_space<smem>>
    %c2 = arith.constant 2 : index
    %6 = memref.load %arg1[%c2] : memref<9xf32, #tpu.memory_space<smem>>
    %c3 = arith.constant 3 : index
    %7 = memref.load %arg1[%c3] : memref<9xf32, #tpu.memory_space<smem>>
    %c4 = arith.constant 4 : index
    %8 = memref.load %arg1[%c4] : memref<9xf32, #tpu.memory_space<smem>>
    %c5 = arith.constant 5 : index
    %9 = memref.load %arg1[%c5] : memref<9xf32, #tpu.memory_space<smem>>
    %c6 = arith.constant 6 : index
    %10 = memref.load %arg1[%c6] : memref<9xf32, #tpu.memory_space<smem>>
    %c7 = arith.constant 7 : index
    %11 = memref.load %arg1[%c7] : memref<9xf32, #tpu.memory_space<smem>>
    %c8 = arith.constant 8 : index
    %12 = memref.load %arg1[%c8] : memref<9xf32, #tpu.memory_space<smem>>
    %13 = vector.broadcast %4 : f32 to vector<8x128xf32>
    %14 = arith.mulf %1, %13 : vector<8x128xf32>
    %15 = vector.broadcast %5 : f32 to vector<8x128xf32>
    %16 = arith.mulf %3, %15 : vector<8x128xf32>
    %17 = arith.addf %14, %16 : vector<8x128xf32>
    %18 = vector.broadcast %8 : f32 to vector<8x128xf32>
    %19 = arith.addf %17, %18 : vector<8x128xf32>
    %cst = arith.constant 0.000000e+00 : f32
    %20 = vector.broadcast %cst : f32 to vector<8x128xf32>
    %21 = arith.maximumf %19, %20 : vector<8x128xf32>
    %22 = vector.broadcast %6 : f32 to vector<8x128xf32>
    %23 = arith.mulf %1, %22 : vector<8x128xf32>
    %24 = vector.broadcast %7 : f32 to vector<8x128xf32>
    %25 = arith.mulf %3, %24 : vector<8x128xf32>
    %26 = arith.addf %23, %25 : vector<8x128xf32>
    %27 = vector.broadcast %9 : f32 to vector<8x128xf32>
    %28 = arith.addf %26, %27 : vector<8x128xf32>
    %cst_6 = arith.constant 0.000000e+00 : f32
    %29 = vector.broadcast %cst_6 : f32 to vector<8x128xf32>
    %30 = arith.maximumf %28, %29 : vector<8x128xf32>
    %31 = vector.broadcast %10 : f32 to vector<8x128xf32>
    %32 = arith.mulf %21, %31 : vector<8x128xf32>
    %33 = vector.broadcast %11 : f32 to vector<8x128xf32>
    %34 = arith.mulf %30, %33 : vector<8x128xf32>
    %35 = arith.addf %32, %34 : vector<8x128xf32>
    %36 = vector.broadcast %12 : f32 to vector<8x128xf32>
    %37 = arith.addf %35, %36 : vector<8x128xf32>
    %c0_7 = arith.constant 0 : index
    %c0_8 = arith.constant 0 : index
    %38 = vector.load %arg3[%c0_7, %c0_8] : memref<8x128xf32, #tpu.memory_space<vmem>>, vector<8x128xf32>
    tpu.vector_store %arg3[%c0_7, %c0_8], %37 {strides = array<i32>} : memref<8x128xf32, #tpu.memory_space<vmem>>, vector<8x128xf32>,
    return
  }
  func.func @transform_0(%arg0: i32) -> i32 {
    %c0_i32 = arith.constant 0 : i32
    %c0_i32_0 = arith.constant 0 : i32
    return %c0_i32 : i32
  }
  func.func @transform_1(%arg0: i32) -> (i32, i32, i32) {
    %c0_i32 = arith.constant 0 : i32
    %c0_i32_0 = arith.constant 0 : i32
    %c0_i32_1 = arith.constant 0 : i32
    return %c0_i32, %arg0, %c0_i32_0 : i32, i32, i32
  }
  func.func @transform_2(%arg0: i32) -> (i32, i32) {
    %c0_i32 = arith.constant 0 : i32
    %c0_i32_0 = arith.constant 0 : i32
    return %arg0, %c0_i32 : i32, i32
  }
}

</mosaic_0001>

<llo_original>
// kernel: tpu_custom_call.1
$region0: #{tpu_custom_call.1}
  #allocation0 [shape = 'u32[]', space=smem, size = 0x4, offset = 0x4, fixed_abs, tag = 'smem constant byte address 0x4 - core index']
  #allocation1 [shape = 'u32[144,128]{1,0:T(1,128)}', space=vmem, size = 0x12000, scoped, tag = 'internal scratch']
  %s0 = inlined_call_operand.hbm [shape: f32[9], index: 0, kind: input, shape index: {}]
  %s1 = inlined_call_operand.hbm [shape: f32[2,8,128], index: 1, kind: input, shape index: {}]
  %s2 = inlined_call_operand.hbm [shape: f32[8,128], index: 2, kind: output, shape index: {}]
  %s3 = sld [smem:[#allocation0]]
  $region26: #{tpu_custom_call.1} parent=0
    _
  %s5 = ssub.s32 1, %s3
  %s6 = scalar_select 0, %s5, %s3
  $region1: #{tpu_custom_call.1} parent=0
    #allocation2 [shape = 'u8[512]{0}', space=smem, size = 0x200, scoped, tag = 'input window, operand 0, single buffered']
    #allocation3 [shape = 's32[1]{0}', space=sflag, size = 0x4, scoped, tag = 'scoped memory for tpu_custom_call.1']
    #allocation4 [shape = 's32[1]{0}', space=sflag, size = 0x4, scoped, tag = 'scoped memory for tpu_custom_call.1']
    #allocation5 [shape = 's32[1]{0}', space=sflag, size = 0x4, scoped, tag = 'scoped memory for tpu_custom_call.1']
    #allocation6 [shape = 'u8[8192]{0}', space=vmem, size = 0x2000, scoped, tag = 'input window, operand 1, single buffered']
    #allocation7 [shape = 'u8[4096]{0}', space=vmem, size = 0x1000, scoped, tag = 'output window, operand 0, single buffered']
    %7 = vsyncpa [#allocation5], 0
    %8 = vsyncpa [#allocation3], 0
    %9 = vsyncpa [#allocation4], 0
    // Predicated region
    $region2: #{tpu_custom_call.1} parent=1 // pred_check
      _
    $region3: #{tpu_custom_call.1} parent=1 // pred_check_branch
      %11 = sbr.rel (0) target = $region5
    $region4: #{tpu_custom_call.1} parent=1 // pred_region
      %s13 = ssub.s32 16, 16
      %14 = vsyncadd [#allocation5], %s13
      %17 = dma.hbm_to_smem %s0, 16, [#allocation2], [#allocation5]
    $region5: #{tpu_custom_call.1} parent=1 // pred_fallthru
      _
    // Predicated region
    $region6: #{tpu_custom_call.1} parent=1 // pred_check
      _
    $region7: #{tpu_custom_call.1} parent=1 // pred_check_branch
      %19 = sbr.rel (0) target = $region9
    $region8: #{tpu_custom_call.1} parent=1 // pred_region
      %s21 = ssub.s32 256, 256
      %22 = vsyncadd [#allocation3], %s21
      %s23 = sshll.u32 [#allocation6], 4
      %s24 = int_to_ptr.vmem [resolvable:$true] %s23
      %29 = dma.hbm_to_vmem [thread:$0]  %s1, 256, %s24, [#allocation3], 128, 128, 8
    $region9: #{tpu_custom_call.1} parent=1 // pred_fallthru
      _
    // Predicated region
    $region10: #{tpu_custom_call.1} parent=1 // pred_check
      _
    $region11: #{tpu_custom_call.1} parent=1 // pred_check_branch
      %31 = sbr.rel (0) target = $region13
    $region12: #{tpu_custom_call.1} parent=1 // pred_region
      %32 = dma.done [#allocation5], 16
    $region13: #{tpu_custom_call.1} parent=1 // pred_fallthru
      _
    // Predicated region
    $region14: #{tpu_custom_call.1} parent=1 // pred_check
      _
    $region15: #{tpu_custom_call.1} parent=1 // pred_check_branch
      %34 = sbr.rel (0) target = $region17
    $region16: #{tpu_custom_call.1} parent=1 // pred_region
      %35 = dma.done [#allocation3], 256
    $region17: #{tpu_custom_call.1} parent=1 // pred_fallthru
      _
    %36 = sfence
    %v37 = vld [vmem:[#allocation6] sm:$0xff]
    %s38 = scalar_lea.vmem [#allocation6], 8
    %v39 = vld [vmem:[%s38] sm:$0xff]
    %s40 = sld [smem:[#allocation2]]
    %s41 = sld [smem:[#allocation2 + $0x1]]
    %s42 = sld [smem:[#allocation2 + $0x2]]
    %s43 = sld [smem:[#allocation2 + $0x3]]
    %s44 = sld [smem:[#allocation2 + $0x4]]
    %s45 = sld [smem:[#allocation2 + $0x5]]
    %s46 = sld [smem:[#allocation2 + $0x6]]
    %s47 = sld [smem:[#allocation2 + $0x7]]
    %s48 = sld [smem:[#allocation2 + $0x8]]
    %v49 = vstv %s40
    %v50 = vmul.f32 %v37, %v49
    %v51 = vstv %s41
    %v52 = vmul.f32 %v39, %v51
    %v53 = vadd.f32 %v50, %v52
    %v54 = vstv %s44
    %v55 = vadd.f32 %v53, %v54
    %v56 = vmax.f32 %v55, 0.0
    %v57 = vstv %s42
    %v58 = vmul.f32 %v37, %v57
    %v59 = vstv %s43
    %v60 = vmul.f32 %v39, %v59
    %v61 = vadd.f32 %v58, %v60
    %v62 = vstv %s45
    %v63 = vadd.f32 %v61, %v62
    %v64 = vmax.f32 %v63, 0.0
    %v65 = vstv %s46
    %v66 = vmul.f32 %v56, %v65
    %v67 = vstv %s47
    %v68 = vmul.f32 %v64, %v67
    %v69 = vadd.f32 %v66, %v68
    %v70 = vstv %s48
    %v71 = vadd.f32 %v69, %v70
    %72 = vst [vmem:[#allocation7] sm:$0xff] %v71
    // Predicated region
    $region18: #{tpu_custom_call.1} parent=1 // pred_check
      _
    $region19: #{tpu_custom_call.1} parent=1 // pred_check_branch
      %74 = sbr.rel (0) target = $region21
    $region20: #{tpu_custom_call.1} parent=1 // pred_region
      %s76 = ssub.s32 128, 128
      %77 = vsyncadd [#allocation4], %s76
      %s79 = sshll.u32 [#allocation7], 4
      %s80 = int_to_ptr.vmem [resolvable:$true] %s79
      %82 = dma.vmem_to_hbm [thread:$0]  %s80, 128, %s2, [#allocation4]
    $region21: #{tpu_custom_call.1} parent=1 // pred_fallthru
      _
    // Predicated region
    $region22: #{tpu_custom_call.1} parent=1 // pred_check
      _
    $region23: #{tpu_custom_call.1} parent=1 // pred_check_branch
      %84 = sbr.rel (0) target = $region25
    $region24: #{tpu_custom_call.1} parent=1 // pred_region
      %85 = dma.done [#allocation4], 128
    $region25: #{tpu_custom_call.1} parent=1 // pred_fallthru
      _
    %86 = vsyncpa [#allocation3], 1
    %87 = vsyncpa [#allocation4], 1
    %88 = vsyncpa [#allocation5], 1

</llo_original>
